<compile_context>
chip_gen: v7x
topology: tpu7x:2x2x1
jax: 0.10.0
libtpu: 0.0.40
codegen_flags: <defaults>
</compile_context>

<pallas_src>
import functools

import jax
import jax.numpy as jnp
from jax import lax
from jax.experimental import pallas as pl
from jax.experimental.pallas import tpu as pltpu


# --------------------------------------------------------------------------- #
# Kernel
# --------------------------------------------------------------------------- #
def _se_kernel(x_ref, w1_ref, b1_ref, w2_ref, b2_ref, o_ref, *, bt, inv_hw, unroll):
    """SE over a (bt, C, HW) channels-first slab.

    C lives on sublanes, HW on lanes for every tile.  The gate is computed as
    (C, 1) / (Csq, 1) column vectors, so the scale never needs a lane<->sublane
    shuffle and broadcasts over HW lanes for free.
    """
    w1 = w1_ref[...]          # (Csq, C)
    b1 = b1_ref[...]          # (Csq, 1)
    w2 = w2_ref[...]          # (C, Csq)
    b2 = b2_ref[...]          # (C, 1)

    def body(b, carry):
        x_b = x_ref[b]                                               # (C, HW) native dtype
        # squeeze: spatial mean; accumulate only the sum in f32 (lane reduce).
        pooled = jnp.sum(x_b, axis=-1, keepdims=True,
                         dtype=jnp.float32) * inv_hw                 # (C, 1) f32
        # excitation (tiny matvecs; MXU has huge slack in this HBM-bound kernel).
        h = jnp.dot(w1, pooled, preferred_element_type=jnp.float32) + b1   # (Csq, 1)
        h = jnp.maximum(h, 0.0)
        s = jnp.dot(w2, h, preferred_element_type=jnp.float32) + b2        # (C, 1)
        s = jax.nn.sigmoid(s)
        # scale in the native dtype; (C, 1) broadcasts over lanes (cheap replicate).
        o_ref[b] = x_b * s.astype(o_ref.dtype)
        return carry

    lax.fori_loop(0, bt, body, 0, unroll=unroll)


# --------------------------------------------------------------------------- #
# Wrapper helpers
# --------------------------------------------------------------------------- #
def _vmem_capacity_bytes():
    """Physical VMEM of the local TPU generation (conservative fallback)."""
    try:
        info = pltpu.get_tpu_info()
        cap = getattr(info, "vmem_capacity_bytes", None)
        if cap:
            return int(cap)
    except Exception:
        pass
    return 64 << 20   # v7x-sized fallback: never overshoot a smaller part


def _device_kind():
    try:
        return jax.devices()[0].device_kind.lower()
    except Exception:
        return ""


def _pick_bt(B, per_image_bytes, vmem_capacity):
    """Images per grid step: biggest slab that keeps 4 double-buffered slabs
    (in + out) around ~40% of physical VMEM, without requiring bt | B."""
    slab_budget = max(per_image_bytes, int(0.10 * vmem_capacity))    # per slab
    bt = max(1, min(B, slab_budget // max(1, per_image_bytes)))
    # Prefer an exact divisor of B when one is within 75% of the cap (avoids a
    # padded last block); otherwise keep the cap and rely on the cdiv grid.
    best_div = 1
    for cand in range(1, int(bt) + 1):
        if B % cand == 0:
            best_div = cand
    if best_div * 4 >= bt * 3:
        bt = best_div
    return int(bt)


# --------------------------------------------------------------------------- #
# Wrapper
# --------------------------------------------------------------------------- #
def squeeze_excitation(x_nchw, w1, b1, w2, b2):
    """x_nchw: [B, C, H, W]; w1: [Csq, C]; b1: [Csq]; w2: [C, Csq]; b2: [C]."""
    B, C, H, W = x_nchw.shape
    Csq = w1.shape[0]
    HW = H * W
    itemsize = jnp.dtype(x_nchw.dtype).itemsize
    inv_hw = float(1.0 / HW)

    vmem_capacity = _vmem_capacity_bytes()
    per_image = C * HW * itemsize
    bt = _pick_bt(B, per_image, vmem_capacity)
    grid_size = pl.cdiv(B, bt)

    # Adaptive unroll of the per-image loop: small late-stage images need the
    # gate chains of a few images in flight; big images are HBM-dominated.
    unroll = int(max(1, min(8, bt, (256 << 10) // max(1, per_image))))

    w_itemsize = jnp.dtype(w1.dtype).itemsize
    weight_bytes = int((w1.size + w2.size + b1.size + b2.size) * w_itemsize)
    slab_bytes = bt * per_image
    # in + out blocks, double-buffered, plus resident weights, plus slack.
    vmem_needed = 4 * slab_bytes + 2 * weight_bytes + (2 << 20)
    vmem_limit = int(min(max(vmem_needed, 16 << 20), vmem_capacity - (4 << 20)))

    # v7x has two TensorCores per chip: split the batch grid axis across them.
    kind = _device_kind()
    if ("v7" in kind or "7x" in kind) and grid_size >= 2:
        dims = (pltpu.CORE_PARALLEL,)
    else:
        dims = ("parallel",)

    cost = pl.CostEstimate(
        flops=int(B * (2 * C * HW + 4 * C * Csq)),   # pool + scale + gate matmuls
        transcendentals=int(B * C),                  # sigmoid
        bytes_accessed=int(2 * B * C * HW * itemsize + weight_bytes),
    )

    kernel = functools.partial(_se_kernel, bt=bt, inv_hw=inv_hw, unroll=unroll)
    x3 = x_nchw.reshape(B, C, HW)                    # metadata-only reshape (NCHW kept)

    out = pl.pallas_call(
        kernel,
        out_shape=jax.ShapeDtypeStruct((B, C, HW), x_nchw.dtype),
        grid_spec=pltpu.PrefetchScalarGridSpec(
            num_scalar_prefetch=0,
            grid=(grid_size,),
            in_specs=[
                pl.BlockSpec((bt, C, HW), lambda i: (i, 0, 0)),   # x slab
                pl.BlockSpec((Csq, C), lambda i: (0, 0)),         # w1 (resident)
                pl.BlockSpec((Csq, 1), lambda i: (0, 0)),         # b1 (column)
                pl.BlockSpec((C, Csq), lambda i: (0, 0)),         # w2 (resident)
                pl.BlockSpec((C, 1), lambda i: (0, 0)),           # b2 (column)
            ],
            out_specs=pl.BlockSpec((bt, C, HW), lambda i: (i, 0, 0)),
        ),
        compiler_params=pltpu.CompilerParams(
            dimension_semantics=dims,
            vmem_limit_bytes=vmem_limit,
        ),
        cost_estimate=cost,
    )(x3, w1, b1.reshape(Csq, 1), w2, b2.reshape(C, 1))

    return out.reshape(B, C, H, W)


# --------------------------------------------------------------------------- #
# Reference + test
# --------------------------------------------------------------------------- #
def _reference(x, w1, b1, w2, b2):
    pooled = jnp.mean(x.astype(jnp.float32), axis=(2, 3))            # (B, C)
    h = jnp.maximum(pooled @ w1.T + b1, 0.0)                         # (B, Csq)
    s = jax.nn.sigmoid(h @ w2.T + b2)                                # (B, C)
    return (x * s[:, :, None, None].astype(x.dtype)).astype(x.dtype)


if __name__ == "__main__":
    key = jax.random.PRNGKey(0)

    def make_case(k, B, C, H, W, Csq, dtype=jnp.float32):
        kx, kw1, kb1, kw2, kb2 = jax.random.split(k, 5)
        x = jax.random.normal(kx, (B, C, H, W), dtype=dtype)
        w1 = jax.random.normal(kw1, (Csq, C), dtype=jnp.float32) * 0.5
        b1 = jax.random.normal(kb1, (Csq,), dtype=jnp.float32) * 0.1
        w2 = jax.random.normal(kw2, (C, Csq), dtype=jnp.float32) * 0.5
        b2 = jax.random.normal(kb2, (C,), dtype=jnp.float32) * 0.1
        return x, w1, b1, w2, b2

    k1, k2 = jax.random.split(key)

    # Case 1: SqueezeExcitation(input_channels=4, squeeze_channels=2) on 16x16
    # spatial (early-stage-like: wide HW, few channels).
    x, w1, b1, w2, b2 = make_case(k1, 2, 4, 16, 16, 2)
    out = jax.block_until_ready(squeeze_excitation(x, w1, b1, w2, b2))
    ref = _reference(x, w1, b1, w2, b2)
    assert out.shape == x.shape
    assert jnp.allclose(out, ref, atol=1e-5, rtol=1e-5), "case1 mismatch vs reference"

    # Case 2: late-RegNet-stage-like shape (wide channels, small spatial).
    x, w1, b1, w2, b2 = make_case(k2, 2, 128, 4, 4, 32)
    out = jax.block_until_ready(squeeze_excitation(x, w1, b1, w2, b2))
    ref = _reference(x, w1, b1, w2, b2)
    assert out.shape == x.shape
    assert jnp.allclose(out, ref, atol=1e-5, rtol=1e-5), "case2 mismatch vs reference"

    print("KERNEL_OK")
</pallas_src>

<mosaic_0001>
module attributes {stable_mosaic.version = 11 : i64} {
  func.func @_se_kernel(%arg0: i32, %arg1: memref<2x4x256xf32, #tpu.memory_space<vmem>>, %arg2: memref<2x4xf32, #tpu.memory_space<vmem>>, %arg3: memref<2x1xf32, #tpu.memory_space<vmem>>, %arg4: memref<4x2xf32, #tpu.memory_space<vmem>>, %arg5: memref<4x1xf32, #tpu.memory_space<vmem>>, %arg6: memref<2x4x256xf32, #tpu.memory_space<vmem>>) attributes {dimension_semantics = [#tpu.dimension_semantics<parallel>], iteration_bounds = array<i64: 1>, scalar_prefetch = 0 : i64, scratch_operands = 0 : i64, tpu.core_type = #tpu.core_type<tc>, window_params = [{transform_indices = @transform_0, window_bounds = array<i64: 2, 4, 256>}, {pipeline_mode = #tpu.pipeline_mode<synchronous>, transform_indices = @transform_1, window_bounds = array<i64: 2, 4>}, {pipeline_mode = #tpu.pipeline_mode<synchronous>, transform_indices = @transform_2, window_bounds = array<i64: 2, 1>}, {pipeline_mode = #tpu.pipeline_mode<synchronous>, transform_indices = @transform_3, window_bounds = array<i64: 4, 2>}, {pipeline_mode = #tpu.pipeline_mode<synchronous>, transform_indices = @transform_4, window_bounds = array<i64: 4, 1>}, {transform_indices = @transform_5, window_bounds = array<i64: 2, 4, 256>}]} {
    %c0 = arith.constant 0 : index
    %c0_0 = arith.constant 0 : index
    %0 = vector.load %arg2[%c0, %c0_0] : memref<2x4xf32, #tpu.memory_space<vmem>>, vector<2x4xf32>
    %c0_1 = arith.constant 0 : index
    %c0_2 = arith.constant 0 : index
    %1 = vector.load %arg3[%c0_1, %c0_2] : memref<2x1xf32, #tpu.memory_space<vmem>>, vector<2x1xf32>
    %c0_3 = arith.constant 0 : index
    %c0_4 = arith.constant 0 : index
    %2 = vector.load %arg4[%c0_3, %c0_4] : memref<4x2xf32, #tpu.memory_space<vmem>>, vector<4x2xf32>
    %c0_5 = arith.constant 0 : index
    %c0_6 = arith.constant 0 : index
    %3 = vector.load %arg5[%c0_5, %c0_6] : memref<4x1xf32, #tpu.memory_space<vmem>>, vector<4x1xf32>
    %c0_i32 = arith.constant 0 : i32
    %4 = arith.index_cast %c0_i32 : i32 to index
    %c0_7 = arith.constant 0 : index
    %c0_8 = arith.constant 0 : index
    %5 = vector.load %arg1[%4, %c0_7, %c0_8] : memref<2x4x256xf32, #tpu.memory_space<vmem>>, vector<1x4x256xf32>
    %6 = vector.shape_cast %5 : vector<1x4x256xf32> to vector<4x256xf32>
    %cst = arith.constant dense<0.000000e+00> : vector<4xf32>
    %7 = vector.multi_reduction <add>, %6, %cst [1] : vector<4x256xf32> to vector<4xf32>
    %8 = vector.shape_cast %7 : vector<4xf32> to vector<4x1xf32>
    %cst_9 = arith.constant 3.906250e-03 : f32
    %9 = vector.broadcast %cst_9 : f32 to vector<4x1xf32>
    %10 = arith.mulf %8, %9 : vector<4x1xf32>
    %cst_10 = arith.constant dense<0.000000e+00> : vector<2x1xf32>
    %11 = tpu.matmul %0, %10, %cst_10 {dimension_numbers = #tpu.dot_dimension_numbers<[1], [0], [0], [1], [0, 0, 1, 1], [], []>} : vector<2x4xf32>, vector<4x1xf32>, vector<2x1xf32> -> vector<2x1xf32>
    %12 = arith.addf %11, %1 : vector<2x1xf32>
    %cst_11 = arith.constant 0.000000e+00 : f32
    %13 = vector.broadcast %cst_11 : f32 to vector<2x1xf32>
    %14 = arith.maximumf %12, %13 : vector<2x1xf32>
    %cst_12 = arith.constant dense<0.000000e+00> : vector<4x1xf32>
    %15 = tpu.matmul %2, %14, %cst_12 {dimension_numbers = #tpu.dot_dimension_numbers<[1], [0], [0], [1], [0, 0, 1, 1], [], []>} : vector<4x2xf32>, vector<2x1xf32>, vector<4x1xf32> -> vector<4x1xf32>
    %16 = arith.addf %15, %3 : vector<4x1xf32>
    %17 = arith.negf %16 : vector<4x1xf32>
    %18 = math.exp %17 : vector<4x1xf32>
    %cst_13 = arith.constant 1.000000e+00 : f32
    %19 = vector.broadcast %cst_13 : f32 to vector<4x1xf32>
    %20 = arith.addf %19, %18 : vector<4x1xf32>
    %21 = arith.divf %19, %20 : vector<4x1xf32>
    %22 = vector.broadcast %21 : vector<4x1xf32> to vector<4x256xf32>
    %23 = arith.mulf %6, %22 : vector<4x256xf32>
    %24 = arith.index_cast %c0_i32 : i32 to index
    %c0_14 = arith.constant 0 : index
    %c0_15 = arith.constant 0 : index
    %25 = vector.load %arg6[%24, %c0_14, %c0_15] : memref<2x4x256xf32, #tpu.memory_space<vmem>>, vector<1x4x256xf32>
    %26 = vector.shape_cast %25 : vector<1x4x256xf32> to vector<4x256xf32>
    %27 = vector.shape_cast %23 : vector<4x256xf32> to vector<1x4x256xf32>
    tpu.vector_store %arg6[%24, %c0_14, %c0_15], %27 {strides = array<i32>} : memref<2x4x256xf32, #tpu.memory_space<vmem>>, vector<1x4x256xf32>,
    %c1_i32 = arith.constant 1 : i32
    %28 = arith.index_cast %c1_i32 : i32 to index
    %c0_16 = arith.constant 0 : index
    %c0_17 = arith.constant 0 : index
    %29 = vector.load %arg1[%28, %c0_16, %c0_17] : memref<2x4x256xf32, #tpu.memory_space<vmem>>, vector<1x4x256xf32>
    %30 = vector.shape_cast %29 : vector<1x4x256xf32> to vector<4x256xf32>
    %cst_18 = arith.constant dense<0.000000e+00> : vector<4xf32>
    %31 = vector.multi_reduction <add>, %30, %cst_18 [1] : vector<4x256xf32> to vector<4xf32>
    %32 = vector.shape_cast %31 : vector<4xf32> to vector<4x1xf32>
    %cst_19 = arith.constant 3.906250e-03 : f32
    %33 = vector.broadcast %cst_19 : f32 to vector<4x1xf32>
    %34 = arith.mulf %32, %33 : vector<4x1xf32>
    %cst_20 = arith.constant dense<0.000000e+00> : vector<2x1xf32>
    %35 = tpu.matmul %0, %34, %cst_20 {dimension_numbers = #tpu.dot_dimension_numbers<[1], [0], [0], [1], [0, 0, 1, 1], [], []>} : vector<2x4xf32>, vector<4x1xf32>, vector<2x1xf32> -> vector<2x1xf32>
    %36 = arith.addf %35, %1 : vector<2x1xf32>
    %cst_21 = arith.constant 0.000000e+00 : f32
    %37 = vector.broadcast %cst_21 : f32 to vector<2x1xf32>
    %38 = arith.maximumf %36, %37 : vector<2x1xf32>
    %cst_22 = arith.constant dense<0.000000e+00> : vector<4x1xf32>
    %39 = tpu.matmul %2, %38, %cst_22 {dimension_numbers = #tpu.dot_dimension_numbers<[1], [0], [0], [1], [0, 0, 1, 1], [], []>} : vector<4x2xf32>, vector<2x1xf32>, vector<4x1xf32> -> vector<4x1xf32>
    %40 = arith.addf %39, %3 : vector<4x1xf32>
    %41 = arith.negf %40 : vector<4x1xf32>
    %42 = math.exp %41 : vector<4x1xf32>
    %cst_23 = arith.constant 1.000000e+00 : f32
    %43 = vector.broadcast %cst_23 : f32 to vector<4x1xf32>
    %44 = arith.addf %43, %42 : vector<4x1xf32>
    %45 = arith.divf %43, %44 : vector<4x1xf32>
    %46 = vector.broadcast %45 : vector<4x1xf32> to vector<4x256xf32>
    %47 = arith.mulf %30, %46 : vector<4x256xf32>
    %48 = arith.index_cast %c1_i32 : i32 to index
    %c0_24 = arith.constant 0 : index
    %c0_25 = arith.constant 0 : index
    %49 = vector.load %arg6[%48, %c0_24, %c0_25] : memref<2x4x256xf32, #tpu.memory_space<vmem>>, vector<1x4x256xf32>
    %50 = vector.shape_cast %49 : vector<1x4x256xf32> to vector<4x256xf32>
    %51 = vector.shape_cast %47 : vector<4x256xf32> to vector<1x4x256xf32>
    tpu.vector_store %arg6[%48, %c0_24, %c0_25], %51 {strides = array<i32>} : memref<2x4x256xf32, #tpu.memory_space<vmem>>, vector<1x4x256xf32>,
    %c2_i32 = arith.constant 2 : i32
    return
  }
  func.func @transform_0(%arg0: i32) -> (i32, i32, i32) {
    %c0_i32 = arith.constant 0 : i32
    %c0_i32_0 = arith.constant 0 : i32
    %c0_i32_1 = arith.constant 0 : i32
    return %arg0, %c0_i32, %c0_i32_0 : i32, i32, i32
  }
  func.func @transform_1(%arg0: i32) -> (i32, i32) {
    %c0_i32 = arith.constant 0 : i32
    %c0_i32_0 = arith.constant 0 : i32
    %c0_i32_1 = arith.constant 0 : i32
    return %c0_i32, %c0_i32_0 : i32, i32
  }
  func.func @transform_2(%arg0: i32) -> (i32, i32) {
    %c0_i32 = arith.constant 0 : i32
    %c0_i32_0 = arith.constant 0 : i32
    %c0_i32_1 = arith.constant 0 : i32
    return %c0_i32, %c0_i32_0 : i32, i32
  }
  func.func @transform_3(%arg0: i32) -> (i32, i32) {
    %c0_i32 = arith.constant 0 : i32
    %c0_i32_0 = arith.constant 0 : i32
    %c0_i32_1 = arith.constant 0 : i32
    return %c0_i32, %c0_i32_0 : i32, i32
  }
  func.func @transform_4(%arg0: i32) -> (i32, i32) {
    %c0_i32 = arith.constant 0 : i32
    %c0_i32_0 = arith.constant 0 : i32
    %c0_i32_1 = arith.constant 0 : i32
    return %c0_i32, %c0_i32_0 : i32, i32
  }
  func.func @transform_5(%arg0: i32) -> (i32, i32, i32) {
    %c0_i32 = arith.constant 0 : i32
    %c0_i32_0 = arith.constant 0 : i32
    %c0_i32_1 = arith.constant 0 : i32
    return %arg0, %c0_i32, %c0_i32_0 : i32, i32, i32
  }
}

</mosaic_0001>

<llo_original>
// kernel: tpu_custom_call.1
$region0: #{tpu_custom_call.1}
  #allocation0 [shape = 'u32[]', space=smem, size = 0x4, offset = 0x4, fixed_abs, tag = 'smem constant byte address 0x4 - core index']
  #allocation1 [shape = 'u32[144,128]{1,0:T(1,128)}', space=vmem, size = 0x12000, scoped, tag = 'internal scratch']
  %s0 = inlined_call_operand.hbm [shape: f32[2,4,256], index: 0, kind: input, shape index: {}]
  %s1 = inlined_call_operand.vmem [shape: f32[2,4], index: 1, kind: input, shape index: {}]
  %s2 = inlined_call_operand.vmem [shape: f32[2,1], index: 2, kind: input, shape index: {}]
  %s3 = inlined_call_operand.vmem [shape: f32[4,2], index: 3, kind: input, shape index: {}]
  %s4 = inlined_call_operand.vmem [shape: f32[4,1], index: 4, kind: input, shape index: {}]
  %s5 = inlined_call_operand.hbm [shape: f32[2,4,256], index: 5, kind: output, shape index: {}]
  %s6 = sld [smem:[#allocation0]]
  $region34: #{tpu_custom_call.1} parent=0
    _
  %s8 = ssub.s32 1, %s6
  %s9 = scalar_select 0, %s8, %s6
  $region1: #{tpu_custom_call.1} parent=0
    #allocation2 [shape = 'u8[8192]{0}', space=vmem, size = 0x2000, scoped, tag = 'input window, operand 0, single buffered']
    #allocation3 [shape = 's32[1]{0}', space=sflag, size = 0x4, scoped, tag = 'scoped memory for tpu_custom_call.1']
    #allocation4 [shape = 's32[1]{0}', space=sflag, size = 0x4, scoped, tag = 'scoped memory for tpu_custom_call.1']
    #allocation5 [shape = 'u8[8192]{0}', space=vmem, size = 0x2000, scoped, tag = 'output window, operand 0, single buffered']
    %10 = vsyncpa [#allocation3], 0
    %11 = vsyncpa [#allocation4], 0
    // Predicated region
    $region2: #{tpu_custom_call.1} parent=1 // pred_check
      _
    $region3: #{tpu_custom_call.1} parent=1 // pred_check_branch
      %13 = sbr.rel (0) target = $region5
    $region4: #{tpu_custom_call.1} parent=1 // pred_region
      %s15 = ssub.s32 256, 256
      %16 = vsyncadd [#allocation3], %s15
      %s17 = sshll.u32 [#allocation2], 4
      %s18 = int_to_ptr.vmem [resolvable:$true] %s17
      %23 = dma.hbm_to_vmem [thread:$0]  %s0, 256, %s18, [#allocation3], 128, 128, 8
    $region5: #{tpu_custom_call.1} parent=1 // pred_fallthru
      _
    // Predicated region
    $region6: #{tpu_custom_call.1} parent=1 // pred_check
      _
    $region7: #{tpu_custom_call.1} parent=1 // pred_check_branch
      %25 = sbr.rel (0) target = $region9
    $region8: #{tpu_custom_call.1} parent=1 // pred_region
      _
    $region9: #{tpu_custom_call.1} parent=1 // pred_fallthru
      _
    // Predicated region
    $region10: #{tpu_custom_call.1} parent=1 // pred_check
      _
    $region11: #{tpu_custom_call.1} parent=1 // pred_check_branch
      %27 = sbr.rel (0) target = $region13
    $region12: #{tpu_custom_call.1} parent=1 // pred_region
      _
    $region13: #{tpu_custom_call.1} parent=1 // pred_fallthru
      _
    // Predicated region
    $region14: #{tpu_custom_call.1} parent=1 // pred_check
      _
    $region15: #{tpu_custom_call.1} parent=1 // pred_check_branch
      %29 = sbr.rel (0) target = $region17
    $region16: #{tpu_custom_call.1} parent=1 // pred_region
      _
    $region17: #{tpu_custom_call.1} parent=1 // pred_fallthru
      _
    // Predicated region
    $region18: #{tpu_custom_call.1} parent=1 // pred_check
      _
    $region19: #{tpu_custom_call.1} parent=1 // pred_check_branch
      %31 = sbr.rel (0) target = $region21
    $region20: #{tpu_custom_call.1} parent=1 // pred_region
      _
    $region21: #{tpu_custom_call.1} parent=1 // pred_fallthru
      _
    // Predicated region
    $region22: #{tpu_custom_call.1} parent=1 // pred_check
      _
    $region23: #{tpu_custom_call.1} parent=1 // pred_check_branch
      %33 = sbr.rel (0) target = $region25
    $region24: #{tpu_custom_call.1} parent=1 // pred_region
      %34 = dma.done [#allocation3], 256
    $region25: #{tpu_custom_call.1} parent=1 // pred_fallthru
      _
    %v35 = vld [vmem:[%s1] sm:$0x3]
    %v36 = vld [vmem:[%s2] sm:$0x3]
    %v37 = vld [vmem:[%s3] sm:$0xf]
    %v38 = vld [vmem:[%s4] sm:$0xf]
    %v39 = vld [vmem:[#allocation2] sm:$0xff]
    %v41 = vcombine.high %v39, %v39
    %vm43 = vcmask 1043456
    %v44 = vsel %vm43, %v39, 0.0
    %v45 = vsel %vm43, %v41, 0.0
    %v46 = vadd.f32 %v44, %v45
    %47 = vadd.xlane.f32.xlu0 %v46
    %v48 = vpop.xlane.xlu0 %47
    %v49 = vmul.f32 %v48, 0.00390625
    %vm50 = vcmask 31744
    %v52 = vsel %vm50, %v35, 0
    %v55 = vsel %vm43, %v49, 0
    %57 = vmatprep.subr.mxu0 0.0
    %58 = vmatpush1.msra.mxu0 %v55
    %59 = vmatprep.subr.mxu0 0.0
    %60 = vmatpush1.msra.mxu0 0.0
    %61 = vmatprep.subr.mxu0 0.0
    %62 = vmatpush1.msra.mxu0 0.0
    %63 = vmatprep.subr.mxu0 0.0
    %64 = vmatpush1.msra.mxu0 0.0
    %65 = vmatprep.subr.mxu0 0.0
    %66 = vmatpush1.msra.mxu0 0.0
    %67 = vmatprep.subr.mxu0 0.0
    %68 = vmatpush1.msra.mxu0 0.0
    %69 = vmatprep.subr.mxu0 0.0
    %70 = vmatpush1.msra.mxu0 0.0
    %71 = vmatprep.subr.mxu0 0.0
    %72 = vmatpush1.msra.mxu0 0.0
    %73 = vmatprep.subr.mxu0 0.0
    %74 = vmatpush1.msra.mxu0 0.0
    %75 = vmatprep.subr.mxu0 0.0
    %76 = vmatpush1.msra.mxu0 0.0
    %77 = vmatprep.subr.mxu0 0.0
    %78 = vmatpush1.msra.mxu0 0.0
    %79 = vmatprep.subr.mxu0 0.0
    %80 = vmatpush1.msra.mxu0 0.0
    %81 = vmatprep.subr.mxu0 0.0
    %82 = vmatpush1.msra.mxu0 0.0
    %83 = vmatprep.subr.mxu0 0.0
    %84 = vmatpush1.msra.mxu0 0.0
    %85 = vmatprep.subr.mxu0 0.0
    %86 = vmatpush1.msra.mxu0 0.0
    %87 = vmatprep.subr.mxu0 0.0
    %88 = vmatpush1.msra.mxu0 0.0
    %89 = vmatprep.subr.mxu0 0.0
    %90 = vmatpush1.msra.mxu0 0.0
    %91 = vmatprep.subr.mxu0 0.0
    %92 = vmatpush1.msra.mxu0 0.0
    %93 = vmatprep.subr.mxu0 0.0
    %94 = vmatpush1.msra.mxu0 0.0
    %95 = vmatprep.subr.mxu0 0.0
    %96 = vmatpush1.msra.mxu0 0.0
    %97 = vmatprep.subr.mxu0 0.0
    %98 = vmatpush1.msra.mxu0 0.0
    %99 = vmatprep.subr.mxu0 0.0
    %100 = vmatpush1.msra.mxu0 0.0
    %101 = vmatprep.subr.mxu0 0.0
    %102 = vmatpush1.msra.mxu0 0.0
    %103 = vmatprep.subr.mxu0 0.0
    %104 = vmatpush1.msra.mxu0 0.0
    %105 = vmatprep.subr.mxu0 0.0
    %106 = vmatpush1.msra.mxu0 0.0
    %107 = vmatprep.subr.mxu0 0.0
    %108 = vmatpush1.msra.mxu0 0.0
    %109 = vmatprep.subr.mxu0 0.0
    %110 = vmatpush1.msra.mxu0 0.0
    %111 = vmatprep.subr.mxu0 0.0
    %112 = vmatpush1.msra.mxu0 0.0
    %113 = vmatprep.subr.mxu0 0.0
    %114 = vmatpush1.msra.mxu0 0.0
    %115 = vmatprep.subr.mxu0 0.0
    %116 = vmatpush1.msra.mxu0 0.0
    %117 = vmatprep.subr.mxu0 0.0
    %118 = vmatpush1.msra.mxu0 0.0
    %119 = vmatprep.subr.mxu0 0.0
    %120 = vmatpush1.msra.mxu0 0.0
    %121 = vmatprep.mubr.f32.mxu0 0.0
    %122 = vmatmul.mubr.f32.gmra.mrb[0].mxu0 %v52
    %v123 = vpop.f32.mrb[0].mxu0
    %v124 = vadd.f32 %v36, %v123
    %v125 = vpop.f32.mrb[0].mxu0
    %126 = vdwg.mxu0
    %v127 = vmax.f32 %v124, 0.0
    %vm128 = vcmask 15360
    %v130 = vsel %vm128, %v37, 0
    %vm132 = vcmask 1041408
    %v134 = vsel %vm132, %v127, 0
    %136 = vmatprep.subr.mxu0 0.0
    %137 = vmatpush1.msra.mxu0 %v134
    %138 = vmatprep.subr.mxu0 0.0
    %139 = vmatpush1.msra.mxu0 0.0
    %140 = vmatprep.subr.mxu0 0.0
    %141 = vmatpush1.msra.mxu0 0.0
    %142 = vmatprep.subr.mxu0 0.0
    %143 = vmatpush1.msra.mxu0 0.0
    %144 = vmatprep.subr.mxu0 0.0
    %145 = vmatpush1.msra.mxu0 0.0
    %146 = vmatprep.subr.mxu0 0.0
    %147 = vmatpush1.msra.mxu0 0.0
    %148 = vmatprep.subr.mxu0 0.0
    %149 = vmatpush1.msra.mxu0 0.0
    %150 = vmatprep.subr.mxu0 0.0
    %151 = vmatpush1.msra.mxu0 0.0
    %152 = vmatprep.subr.mxu0 0.0
    %153 = vmatpush1.msra.mxu0 0.0
    %154 = vmatprep.subr.mxu0 0.0
    %155 = vmatpush1.msra.mxu0 0.0
    %156 = vmatprep.subr.mxu0 0.0
    %157 = vmatpush1.msra.mxu0 0.0
    %158 = vmatprep.subr.mxu0 0.0
    %159 = vmatpush1.msra.mxu0 0.0
    %160 = vmatprep.subr.mxu0 0.0
    %161 = vmatpush1.msra.mxu0 0.0
    %162 = vmatprep.subr.mxu0 0.0
    %163 = vmatpush1.msra.mxu0 0.0
    %164 = vmatprep.subr.mxu0 0.0
    %165 = vmatpush1.msra.mxu0 0.0
    %166 = vmatprep.subr.mxu0 0.0
    %167 = vmatpush1.msra.mxu0 0.0
    %168 = vmatprep.subr.mxu0 0.0
    %169 = vmatpush1.msra.mxu0 0.0
    %170 = vmatprep.subr.mxu0 0.0
    %171 = vmatpush1.msra.mxu0 0.0
    %172 = vmatprep.subr.mxu0 0.0
    %173 = vmatpush1.msra.mxu0 0.0
    %174 = vmatprep.subr.mxu0 0.0
    %175 = vmatpush1.msra.mxu0 0.0
    %176 = vmatprep.subr.mxu0 0.0
    %177 = vmatpush1.msra.mxu0 0.0
    %178 = vmatprep.subr.mxu0 0.0
    %179 = vmatpush1.msra.mxu0 0.0
    %180 = vmatprep.subr.mxu0 0.0
    %181 = vmatpush1.msra.mxu0 0.0
    %182 = vmatprep.subr.mxu0 0.0
    %183 = vmatpush1.msra.mxu0 0.0
    %184 = vmatprep.subr.mxu0 0.0
    %185 = vmatpush1.msra.mxu0 0.0
    %186 = vmatprep.subr.mxu0 0.0
    %187 = vmatpush1.msra.mxu0 0.0
    %188 = vmatprep.subr.mxu0 0.0
    %189 = vmatpush1.msra.mxu0 0.0
    %190 = vmatprep.subr.mxu0 0.0
    %191 = vmatpush1.msra.mxu0 0.0
    %192 = vmatprep.subr.mxu0 0.0
    %193 = vmatpush1.msra.mxu0 0.0
    %194 = vmatprep.subr.mxu0 0.0
    %195 = vmatpush1.msra.mxu0 0.0
    %196 = vmatprep.subr.mxu0 0.0
    %197 = vmatpush1.msra.mxu0 0.0
    %198 = vmatprep.subr.mxu0 0.0
    %199 = vmatpush1.msra.mxu0 0.0
    %200 = vmatprep.mubr.f32.mxu0 0.0
    %201 = vmatmul.mubr.f32.gmra.mrb[0].mxu0 %v130
    %v202 = vpop.f32.mrb[0].mxu0
    %v203 = vadd.f32 %v38, %v202
    %v204 = vpop.f32.mrb[0].mxu0
    %205 = vdwg.mxu0
    %v206 = vxor.u32 %v203, 2147483648
    %v207 = vmul.f32 %v206, 1.442695
    %v208 = vpow.pop %v207
    %v209 = vadd.f32 %v208, 1.0
    %v210 = vrcp.pop %v209
    %v211 = vmul.f32 1.0, %v210
    %213 = vset.pattern.permute.xlu0 0
    %214 = vperm.xlu0 %213, %v211
    %v215 = vpop.permute.xlu0 %214
    %v217 = vunpack.c.l.s4 839922192
    %v218 = vunpack.c.0.s8 %v217
    %v219 = vlaneseq
    %v220 = vshrl.u32 %v219, 7
    %v221 = vsub.s32 %v218, %v220
    %v222 = vrot.slane %v215, %v221
    %v224 = vmul.f32 %v39, %v222
    %225 = vst [vmem:[#allocation5] sm:$0xff] %v224
    %s226 = scalar_lea.vmem [#allocation2], 8
    %v227 = vld [vmem:[%s226] sm:$0xff]
    %v229 = vcombine.high %v227, %v227
    %v231 = vsel %vm43, %v227, 0.0
    %v232 = vsel %vm43, %v229, 0.0
    %v233 = vadd.f32 %v231, %v232
    %234 = vadd.xlane.f32.xlu0 %v233
    %v235 = vpop.xlane.xlu0 %234
    %v236 = vmul.f32 %v235, 0.00390625
    %v238 = vsel %vm43, %v236, 0
    %240 = vmatprep.subr.mxu0 0.0
    %241 = vmatpush1.msra.mxu0 %v238
    %242 = vmatprep.subr.mxu0 0.0
    %243 = vmatpush1.msra.mxu0 0.0
    %244 = vmatprep.subr.mxu0 0.0
    %245 = vmatpush1.msra.mxu0 0.0
    %246 = vmatprep.subr.mxu0 0.0
    %247 = vmatpush1.msra.mxu0 0.0
    %248 = vmatprep.subr.mxu0 0.0
    %249 = vmatpush1.msra.mxu0 0.0
    %250 = vmatprep.subr.mxu0 0.0
    %251 = vmatpush1.msra.mxu0 0.0
    %252 = vmatprep.subr.mxu0 0.0
    %253 = vmatpush1.msra.mxu0 0.0
    %254 = vmatprep.subr.mxu0 0.0
    %255 = vmatpush1.msra.mxu0 0.0
    %256 = vmatprep.subr.mxu0 0.0
    %257 = vmatpush1.msra.mxu0 0.0
    %258 = vmatprep.subr.mxu0 0.0
    %259 = vmatpush1.msra.mxu0 0.0
    %260 = vmatprep.subr.mxu0 0.0
    %261 = vmatpush1.msra.mxu0 0.0
    %262 = vmatprep.subr.mxu0 0.0
    %263 = vmatpush1.msra.mxu0 0.0
    %264 = vmatprep.subr.mxu0 0.0
    %265 = vmatpush1.msra.mxu0 0.0
    %266 = vmatprep.subr.mxu0 0.0
    %267 = vmatpush1.msra.mxu0 0.0
    %268 = vmatprep.subr.mxu0 0.0
    %269 = vmatpush1.msra.mxu0 0.0
    %270 = vmatprep.subr.mxu0 0.0
    %271 = vmatpush1.msra.mxu0 0.0
    %272 = vmatprep.subr.mxu0 0.0
    %273 = vmatpush1.msra.mxu0 0.0
    %274 = vmatprep.subr.mxu0 0.0
    %275 = vmatpush1.msra.mxu0 0.0
    %276 = vmatprep.subr.mxu0 0.0
    %277 = vmatpush1.msra.mxu0 0.0
    %278 = vmatprep.subr.mxu0 0.0
    %279 = vmatpush1.msra.mxu0 0.0
    %280 = vmatprep.subr.mxu0 0.0
    %281 = vmatpush1.msra.mxu0 0.0
    %282 = vmatprep.subr.mxu0 0.0
    %283 = vmatpush1.msra.mxu0 0.0
    %284 = vmatprep.subr.mxu0 0.0
    %285 = vmatpush1.msra.mxu0 0.0
    %286 = vmatprep.subr.mxu0 0.0
    %287 = vmatpush1.msra.mxu0 0.0
    %288 = vmatprep.subr.mxu0 0.0
    %289 = vmatpush1.msra.mxu0 0.0
    %290 = vmatprep.subr.mxu0 0.0
    %291 = vmatpush1.msra.mxu0 0.0
    %292 = vmatprep.subr.mxu0 0.0
    %293 = vmatpush1.msra.mxu0 0.0
    %294 = vmatprep.subr.mxu0 0.0
    %295 = vmatpush1.msra.mxu0 0.0
    %296 = vmatprep.subr.mxu0 0.0
    %297 = vmatpush1.msra.mxu0 0.0
    %298 = vmatprep.subr.mxu0 0.0
    %299 = vmatpush1.msra.mxu0 0.0
    %300 = vmatprep.subr.mxu0 0.0
    %301 = vmatpush1.msra.mxu0 0.0
    %302 = vmatprep.subr.mxu0 0.0
    %303 = vmatpush1.msra.mxu0 0.0
    %304 = vmatprep.mubr.f32.mxu0 0.0
    %305 = vmatmul.mubr.f32.gmra.mrb[0].mxu0 %v52
    %v306 = vpop.f32.mrb[0].mxu0
    %v307 = vadd.f32 %v36, %v306
    %v308 = vpop.f32.mrb[0].mxu0
    %309 = vdwg.mxu0
    %v310 = vmax.f32 %v307, 0.0
    %v312 = vsel %vm132, %v310, 0
    %314 = vmatprep.subr.mxu0 0.0
    %315 = vmatpush1.msra.mxu0 %v312
    %316 = vmatprep.subr.mxu0 0.0
    %317 = vmatpush1.msra.mxu0 0.0
    %318 = vmatprep.subr.mxu0 0.0
    %319 = vmatpush1.msra.mxu0 0.0
    %320 = vmatprep.subr.mxu0 0.0
    %321 = vmatpush1.msra.mxu0 0.0
    %322 = vmatprep.subr.mxu0 0.0
    %323 = vmatpush1.msra.mxu0 0.0
    %324 = vmatprep.subr.mxu0 0.0
    %325 = vmatpush1.msra.mxu0 0.0
    %326 = vmatprep.subr.mxu0 0.0
    %327 = vmatpush1.msra.mxu0 0.0
    %328 = vmatprep.subr.mxu0 0.0
    %329 = vmatpush1.msra.mxu0 0.0
    %330 = vmatprep.subr.mxu0 0.0
    %331 = vmatpush1.msra.mxu0 0.0
    %332 = vmatprep.subr.mxu0 0.0
    %333 = vmatpush1.msra.mxu0 0.0
    %334 = vmatprep.subr.mxu0 0.0
    %335 = vmatpush1.msra.mxu0 0.0
    %336 = vmatprep.subr.mxu0 0.0
    %337 = vmatpush1.msra.mxu0 0.0
    %338 = vmatprep.subr.mxu0 0.0
    %339 = vmatpush1.msra.mxu0 0.0
    %340 = vmatprep.subr.mxu0 0.0
    %341 = vmatpush1.msra.mxu0 0.0
    %342 = vmatprep.subr.mxu0 0.0
    %343 = vmatpush1.msra.mxu0 0.0
    %344 = vmatprep.subr.mxu0 0.0
    %345 = vmatpush1.msra.mxu0 0.0
    %346 = vmatprep.subr.mxu0 0.0
    %347 = vmatpush1.msra.mxu0 0.0
    %348 = vmatprep.subr.mxu0 0.0
    %349 = vmatpush1.msra.mxu0 0.0
    %350 = vmatprep.subr.mxu0 0.0
    %351 = vmatpush1.msra.mxu0 0.0
    %352 = vmatprep.subr.mxu0 0.0
    %353 = vmatpush1.msra.mxu0 0.0
    %354 = vmatprep.subr.mxu0 0.0
    %355 = vmatpush1.msra.mxu0 0.0
    %356 = vmatprep.subr.mxu0 0.0
    %357 = vmatpush1.msra.mxu0 0.0
    %358 = vmatprep.subr.mxu0 0.0
    %359 = vmatpush1.msra.mxu0 0.0
    %360 = vmatprep.subr.mxu0 0.0
    %361 = vmatpush1.msra.mxu0 0.0
    %362 = vmatprep.subr.mxu0 0.0
    %363 = vmatpush1.msra.mxu0 0.0
    %364 = vmatprep.subr.mxu0 0.0
    %365 = vmatpush1.msra.mxu0 0.0
    %366 = vmatprep.subr.mxu0 0.0
    %367 = vmatpush1.msra.mxu0 0.0
    %368 = vmatprep.subr.mxu0 0.0
    %369 = vmatpush1.msra.mxu0 0.0
    %370 = vmatprep.subr.mxu0 0.0
    %371 = vmatpush1.msra.mxu0 0.0
    %372 = vmatprep.subr.mxu0 0.0
    %373 = vmatpush1.msra.mxu0 0.0
    %374 = vmatprep.subr.mxu0 0.0
    %375 = vmatpush1.msra.mxu0 0.0
    %376 = vmatprep.subr.mxu0 0.0
    %377 = vmatpush1.msra.mxu0 0.0
    %378 = vmatprep.mubr.f32.mxu0 0.0
    %379 = vmatmul.mubr.f32.gmra.mrb[0].mxu0 %v130
    %v380 = vpop.f32.mrb[0].mxu0
    %v381 = vadd.f32 %v38, %v380
    %v382 = vpop.f32.mrb[0].mxu0
    %383 = vdwg.mxu0
    %v384 = vxor.u32 %v381, 2147483648
    %v385 = vmul.f32 %v384, 1.442695
    %v386 = vpow.pop %v385
    %v387 = vadd.f32 %v386, 1.0
    %v388 = vrcp.pop %v387
    %v389 = vmul.f32 1.0, %v388
    %391 = vset.pattern.permute.xlu0 0
    %392 = vperm.xlu0 %391, %v389
    %v393 = vpop.permute.xlu0 %392
    %v395 = vunpack.c.l.s4 839922192
    %v396 = vunpack.c.0.s8 %v395
    %v397 = vlaneseq
    %v398 = vshrl.u32 %v397, 7
    %v399 = vsub.s32 %v396, %v398
    %v400 = vrot.slane %v393, %v399
    %v402 = vmul.f32 %v227, %v400
    %s403 = scalar_lea.vmem [#allocation5], 8
    %404 = vst [vmem:[%s403] sm:$0xff] %v402
    // Predicated region
    $region26: #{tpu_custom_call.1} parent=1 // pred_check
      _
    $region27: #{tpu_custom_call.1} parent=1 // pred_check_branch
      %406 = sbr.rel (0) target = $region29
    $region28: #{tpu_custom_call.1} parent=1 // pred_region
      %s408 = ssub.s32 256, 256
      %409 = vsyncadd [#allocation4], %s408
      %s410 = sshll.u32 [#allocation5], 4
      %s411 = int_to_ptr.vmem [resolvable:$true] %s410
      %416 = dma.vmem_to_hbm [thread:$0]  %s411, 256, %s5, [#allocation4], 128, 128, 8
    $region29: #{tpu_custom_call.1} parent=1 // pred_fallthru
      _
    // Predicated region
    $region30: #{tpu_custom_call.1} parent=1 // pred_check
      _
    $region31: #{tpu_custom_call.1} parent=1 // pred_check_branch
      %418 = sbr.rel (0) target = $region33
    $region32: #{tpu_custom_call.1} parent=1 // pred_region
      %419 = dma.done [#allocation4], 256
    $region33: #{tpu_custom_call.1} parent=1 // pred_fallthru
      _
    %420 = vsyncpa [#allocation3], 1
    %421 = vsyncpa [#allocation4], 1

</llo_original>
